<compile_context>
chip_gen: v7x
topology: tpu7x:2x2x1
jax: 0.10.0
libtpu: 0.0.40
codegen_flags: <defaults>
</compile_context>

<pallas_src>
import functools

import jax
import jax.numpy as jnp
from jax.experimental import pallas as pl
from jax.experimental.pallas import tpu as pltpu


def _row_reduce(v):
    """Sum an (..., S, 128) tensor over S in 8-row slabs -> (..., 8, 128).

    Static 8-aligned slices -> plain vreg-wise VPU adds (no XLU sublane reduce).
    """
    S = v.shape[-2]
    out = v[..., 0:8, :]
    for k in range(1, S // 8):
        out = out + v[..., 8 * k:8 * (k + 1), :]
    return out


def _loss_kernel(x_ref, t_ref,
                 tp_ref, ps_ref, cnt_ref, ce_ref, fo_ref,
                 *, num_classes, gamma, focal_smooth, padded):
    i = pl.program_id(2)

    # Output blocks are resident across the reduction axis -> use them directly
    # as accumulators (init on first step of the pixel-tile axis).
    @pl.when(i == 0)
    def _init():
        tp_ref[...] = jnp.zeros_like(tp_ref)
        ps_ref[...] = jnp.zeros_like(ps_ref)
        cnt_ref[...] = jnp.zeros_like(cnt_ref)
        ce_ref[...] = jnp.zeros_like(ce_ref)
        fo_ref[...] = jnp.zeros_like(fo_ref)

    logits = x_ref[...].astype(jnp.float32)          # (C, S, 128)
    tgt = t_ref[...]                                 # (1, S, 128) int32, -1 = pad

    # Softmax over the channel axis (major dim -> plain VPU max/adds, no XLU).
    m = jnp.max(logits, axis=0, keepdims=True)       # (1, S, 128)
    e = jnp.exp(logits - m)
    s = jnp.sum(e, axis=0, keepdims=True)
    inv_s = pl.reciprocal(s, approx=False)           # one EUP op per pixel
    p = e * inv_s                                    # (C, S, 128)

    cls = jax.lax.broadcasted_iota(jnp.int32, logits.shape, 0)
    yoh = (cls == tgt).astype(jnp.float32)           # one-hot target; 0 at pads

    pyoh = p * yoh

    if padded:
        valid = (tgt >= 0).astype(jnp.float32)       # (1, S, 128)
        p_val = p * valid
    else:
        valid = None
        p_val = p

    # SoftDice partial sums (batch_dice=True): reduce-before-accumulate.
    #   tp_c  = sum p*yoh ;  fp_c = sum_valid p - tp_c ;  fn_c = count_c - tp_c
    tp_ref[...] += _row_reduce(pyoh)
    ps_ref[...] += _row_reduce(p_val)
    cnt_ref[...] += _row_reduce(yoh)

    # Cross-entropy partial sum without materializing log-softmax:
    #   -log_softmax[target] = log(s) + m - logits[target]
    tgt_logit = jnp.sum(yoh * logits, axis=0, keepdims=True)
    ce_term = jnp.log(s) + m - tgt_logit             # (1, S, 128)

    # Focal loss partial sum (alpha = 1 for every class).
    # clip(one_hot, lo, hi) dot p == lo + (hi - lo) * p_target  (since sum_c p = 1)
    lo = focal_smooth / (num_classes - 1) if num_classes > 1 else 0.0
    hi = 1.0 - focal_smooth
    p_t = jnp.sum(pyoh, axis=0, keepdims=True)
    pt = lo + (hi - lo) * p_t + focal_smooth
    q = 1.0 - pt
    g = float(gamma)
    if g.is_integer() and g >= 1.0:                  # integer pow -> VPU multiplies
        qg = q
        for _ in range(int(g) - 1):
            qg = qg * q
    elif g == 0.0:
        qg = jnp.ones_like(q)
    else:
        qg = q ** g
    fo_term = -qg * jnp.log(pt)                      # (1, S, 128)

    if padded:
        ce_term = ce_term * valid
        fo_term = fo_term * valid

    ce_ref[...] += _row_reduce(ce_term)[0]           # (8, 128)
    fo_ref[...] += _row_reduce(fo_term)[0]


def auto_weighted_dc_ce_focal_loss(net_output, target, *,
                                   dice_smooth=1e-5, focal_smooth=1e-5,
                                   gamma=2.0, do_bg=False,
                                   sublane_rows=64, num_splits=2):
    """net_output: (B, C, H, W) float; target: (B, 1, H, W) int labels."""
    B, C, H, W = net_output.shape
    HW = H * W
    n_valid = B * HW

    # Pick the tile: S sublane rows x 128 lanes (S*128 pixels per tile), then pad
    # the pixel axis up to num_splits * T * S rows. Padded pixels carry target=-1.
    rows = -(-HW // 128)                                  # 128-lane rows needed
    rows_per_split = -(-rows // num_splits)
    S = min(int(sublane_rows), max(8, -(-rows_per_split // 8) * 8))
    T = -(-rows_per_split // S)
    R = num_splits * T * S
    hwp = R * 128
    padded = hwp != HW

    # NCHW kept contiguous; reshape (free) to (B, C, HW) -> (B, C, R, 128).
    # No f32 upcast in HBM: native dtype streamed, cast inside the kernel.
    x = net_output.reshape(B, C, HW)
    t = target.reshape(B, 1, HW).astype(jnp.int32)
    if padded:
        x = jnp.pad(x, ((0, 0), (0, 0), (0, hwp - HW)))
        t = jnp.pad(t, ((0, 0), (0, 0), (0, hwp - HW)), constant_values=-1)
    x = x.reshape(B, C, R, 128)
    t = t.reshape(B, 1, R, 128)

    kernel = functools.partial(_loss_kernel, num_classes=C, gamma=float(gamma),
                               focal_smooth=float(focal_smooth), padded=padded)

    f32 = jnp.float32
    NS = num_splits
    in_map = lambda sp, b, i: (b, 0, sp * T + i, 0)
    out_map5 = lambda sp, b, i: (sp, b, 0, 0, 0)
    out_map4 = lambda sp, b, i: (sp, b, 0, 0)

    tp_p, ps_p, cnt_p, ce_p, fo_p = pl.pallas_call(
        kernel,
        out_shape=(jax.ShapeDtypeStruct((NS, B, C, 8, 128), f32),
                   jax.ShapeDtypeStruct((NS, B, C, 8, 128), f32),
                   jax.ShapeDtypeStruct((NS, B, C, 8, 128), f32),
                   jax.ShapeDtypeStruct((NS, B, 8, 128), f32),
                   jax.ShapeDtypeStruct((NS, B, 8, 128), f32)),
        grid_spec=pltpu.PrefetchScalarGridSpec(
            num_scalar_prefetch=0,
            grid=(NS, B, T),
            in_specs=[pl.BlockSpec((pl.Squeezed(), C, S, 128), in_map),
                      pl.BlockSpec((pl.Squeezed(), 1, S, 128), in_map)],
            out_specs=[pl.BlockSpec((pl.Squeezed(), pl.Squeezed(), C, 8, 128), out_map5),
                       pl.BlockSpec((pl.Squeezed(), pl.Squeezed(), C, 8, 128), out_map5),
                       pl.BlockSpec((pl.Squeezed(), pl.Squeezed(), C, 8, 128), out_map5),
                       pl.BlockSpec((pl.Squeezed(), pl.Squeezed(), 8, 128), out_map4),
                       pl.BlockSpec((pl.Squeezed(), pl.Squeezed(), 8, 128), out_map4)]),
        compiler_params=pltpu.CompilerParams(
            dimension_semantics=("parallel", "parallel", "arbitrary")),
    )(x, t)

    # Tiny host-side reductions / algebra.
    tp = jnp.sum(tp_p, axis=(0, 1, 3, 4))          # (C,)
    psum = jnp.sum(ps_p, axis=(0, 1, 3, 4))        # (C,)  sum of p over valid pixels
    cnt = jnp.sum(cnt_p, axis=(0, 1, 3, 4))        # (C,)  per-class label counts
    fp = psum - tp
    fn = cnt - tp
    ce_sum = jnp.sum(ce_p)
    fo_sum = jnp.sum(fo_p)

    # SoftDiceLoss (batch_dice=True, do_bg=False)
    nominator = 2.0 * tp + dice_smooth
    denominator = jnp.maximum(2.0 * tp + fp + fn + dice_smooth, 1e-8)
    dc = nominator / denominator
    if not do_bg:
        dc = dc[1:]
    dc_loss = -jnp.mean(dc)

    # RobustCrossEntropyLoss (mean reduction) and FocalLoss (size_average=True)
    ce_loss = ce_sum / n_valid
    focal_loss = fo_sum / n_valid

    # AutomaticWeightedLoss(3) with params initialized to ones
    # TODO(synk): if learnable AWL params are plugged in, pass them here instead.
    awl_params = jnp.ones((3,), dtype=jnp.float32)
    losses = jnp.stack([dc_loss, ce_loss, focal_loss])
    result = jnp.sum(0.5 / awl_params ** 2 * losses + jnp.log(1.0 + awl_params ** 2))
    return result


def _reference_loss(net_output, target, *, dice_smooth=1e-5, focal_smooth=1e-5,
                    gamma=2.0, do_bg=False):
    """Pure-JAX reference mirroring the PyTorch forward pass."""
    B, C, H, W = net_output.shape
    x = net_output.astype(jnp.float32)
    p = jax.nn.softmax(x, axis=1)
    tgt = target[:, 0].astype(jnp.int32)
    yoh = jax.nn.one_hot(tgt, C, axis=1, dtype=jnp.float32)        # (B,C,H,W)

    tp = jnp.sum(p * yoh, axis=(0, 2, 3))
    fp = jnp.sum(p * (1.0 - yoh), axis=(0, 2, 3))
    fn = jnp.sum((1.0 - p) * yoh, axis=(0, 2, 3))
    dc = (2.0 * tp + dice_smooth) / jnp.maximum(2.0 * tp + fp + fn + dice_smooth, 1e-8)
    if not do_bg:
        dc = dc[1:]
    dc_loss = -jnp.mean(dc)

    logsm = jax.nn.log_softmax(x, axis=1)
    ce_loss = -jnp.mean(jnp.sum(yoh * logsm, axis=1))

    oh_s = jnp.clip(yoh, focal_smooth / (C - 1), 1.0 - focal_smooth)
    pt = jnp.sum(oh_s * p, axis=1) + focal_smooth
    focal_loss = jnp.mean(-((1.0 - pt) ** gamma) * jnp.log(pt))

    awl_params = jnp.ones((3,), dtype=jnp.float32)
    losses = jnp.stack([dc_loss, ce_loss, focal_loss])
    return jnp.sum(0.5 / awl_params ** 2 * losses + jnp.log(1.0 + awl_params ** 2))


if __name__ == "__main__":
    key = jax.random.PRNGKey(0)
    k1, k2 = jax.random.split(key)
    B, C, H, W = 2, 4, 16, 16
    net_output = jax.random.normal(k1, (B, C, H, W), dtype=jnp.float32)
    target = jax.random.randint(k2, (B, 1, H, W), 0, C, dtype=jnp.int32)

    out = auto_weighted_dc_ce_focal_loss(net_output, target)
    out = jax.block_until_ready(out)

    ref = jax.block_until_ready(_reference_loss(net_output, target))
    assert jnp.allclose(out, ref, atol=1e-4, rtol=1e-4), (out, ref)

    print("KERNEL_OK")
</pallas_src>

<mosaic_0001>
module attributes {stable_mosaic.version = 11 : i64} {
  func.func @_loss_kernel(%arg0: i32, %arg1: i32, %arg2: i32, %arg3: memref<1x4x8x128xf32, #tpu.memory_space<vmem>>, %arg4: memref<1x1x8x128xi32, #tpu.memory_space<vmem>>, %arg5: memref<1x1x4x8x128xf32, #tpu.memory_space<vmem>>, %arg6: memref<1x1x4x8x128xf32, #tpu.memory_space<vmem>>, %arg7: memref<1x1x4x8x128xf32, #tpu.memory_space<vmem>>, %arg8: memref<1x1x8x128xf32, #tpu.memory_space<vmem>>, %arg9: memref<1x1x8x128xf32, #tpu.memory_space<vmem>>) attributes {dimension_semantics = [#tpu.dimension_semantics<parallel>, #tpu.dimension_semantics<parallel>, #tpu.dimension_semantics<arbitrary>], iteration_bounds = array<i64: 2, 2, 1>, scalar_prefetch = 0 : i64, scratch_operands = 0 : i64, tpu.core_type = #tpu.core_type<tc>, window_params = [{transform_indices = @transform_0, window_bounds = array<i64: 1, 4, 8, 128>}, {transform_indices = @transform_1, window_bounds = array<i64: 1, 1, 8, 128>}, {transform_indices = @transform_2, window_bounds = array<i64: 1, 1, 4, 8, 128>}, {transform_indices = @transform_3, window_bounds = array<i64: 1, 1, 4, 8, 128>}, {transform_indices = @transform_4, window_bounds = array<i64: 1, 1, 4, 8, 128>}, {transform_indices = @transform_5, window_bounds = array<i64: 1, 1, 8, 128>}, {transform_indices = @transform_6, window_bounds = array<i64: 1, 1, 8, 128>}]} {
    %c0_i32 = arith.constant 0 : i32
    %0 = arith.cmpi eq, %arg2, %c0_i32 : i32
    %1 = arith.extui %0 : i1 to i32
    %c0_i32_0 = arith.constant 0 : i32
    %2 = arith.cmpi ne, %1, %c0_i32_0 : i32
    scf.if %2 {
      %cst_63 = arith.constant 0.000000e+00 : f32
      %84 = vector.broadcast %cst_63 : f32 to vector<4x8x128xf32>
      %c0_64 = arith.constant 0 : index
      %c0_65 = arith.constant 0 : index
      %c0_66 = arith.constant 0 : index
      %c0_67 = arith.constant 0 : index
      %c0_68 = arith.constant 0 : index
      %85 = vector.load %arg5[%c0_64, %c0_65, %c0_66, %c0_67, %c0_68] : memref<1x1x4x8x128xf32, #tpu.memory_space<vmem>>, vector<1x1x4x8x128xf32>
      %86 = vector.shape_cast %85 : vector<1x1x4x8x128xf32> to vector<4x8x128xf32>
      %87 = vector.shape_cast %84 : vector<4x8x128xf32> to vector<1x1x4x8x128xf32>
      tpu.vector_store %arg5[%c0_64, %c0_65, %c0_66, %c0_67, %c0_68], %87 {strides = array<i32>} : memref<1x1x4x8x128xf32, #tpu.memory_space<vmem>>, vector<1x1x4x8x128xf32>,
      %cst_69 = arith.constant 0.000000e+00 : f32
      %88 = vector.broadcast %cst_69 : f32 to vector<4x8x128xf32>
      %c0_70 = arith.constant 0 : index
      %c0_71 = arith.constant 0 : index
      %c0_72 = arith.constant 0 : index
      %c0_73 = arith.constant 0 : index
      %c0_74 = arith.constant 0 : index
      %89 = vector.load %arg6[%c0_70, %c0_71, %c0_72, %c0_73, %c0_74] : memref<1x1x4x8x128xf32, #tpu.memory_space<vmem>>, vector<1x1x4x8x128xf32>
      %90 = vector.shape_cast %89 : vector<1x1x4x8x128xf32> to vector<4x8x128xf32>
      %91 = vector.shape_cast %88 : vector<4x8x128xf32> to vector<1x1x4x8x128xf32>
      tpu.vector_store %arg6[%c0_70, %c0_71, %c0_72, %c0_73, %c0_74], %91 {strides = array<i32>} : memref<1x1x4x8x128xf32, #tpu.memory_space<vmem>>, vector<1x1x4x8x128xf32>,
      %cst_75 = arith.constant 0.000000e+00 : f32
      %92 = vector.broadcast %cst_75 : f32 to vector<4x8x128xf32>
      %c0_76 = arith.constant 0 : index
      %c0_77 = arith.constant 0 : index
      %c0_78 = arith.constant 0 : index
      %c0_79 = arith.constant 0 : index
      %c0_80 = arith.constant 0 : index
      %93 = vector.load %arg7[%c0_76, %c0_77, %c0_78, %c0_79, %c0_80] : memref<1x1x4x8x128xf32, #tpu.memory_space<vmem>>, vector<1x1x4x8x128xf32>
      %94 = vector.shape_cast %93 : vector<1x1x4x8x128xf32> to vector<4x8x128xf32>
      %95 = vector.shape_cast %92 : vector<4x8x128xf32> to vector<1x1x4x8x128xf32>
      tpu.vector_store %arg7[%c0_76, %c0_77, %c0_78, %c0_79, %c0_80], %95 {strides = array<i32>} : memref<1x1x4x8x128xf32, #tpu.memory_space<vmem>>, vector<1x1x4x8x128xf32>,
      %cst_81 = arith.constant 0.000000e+00 : f32
      %96 = vector.broadcast %cst_81 : f32 to vector<8x128xf32>
      %c0_82 = arith.constant 0 : index
      %c0_83 = arith.constant 0 : index
      %c0_84 = arith.constant 0 : index
      %c0_85 = arith.constant 0 : index
      %97 = vector.load %arg8[%c0_82, %c0_83, %c0_84, %c0_85] : memref<1x1x8x128xf32, #tpu.memory_space<vmem>>, vector<1x1x8x128xf32>
      %98 = vector.shape_cast %97 : vector<1x1x8x128xf32> to vector<8x128xf32>
      %99 = vector.shape_cast %96 : vector<8x128xf32> to vector<1x1x8x128xf32>
      tpu.vector_store %arg8[%c0_82, %c0_83, %c0_84, %c0_85], %99 {strides = array<i32>} : memref<1x1x8x128xf32, #tpu.memory_space<vmem>>, vector<1x1x8x128xf32>,
      %cst_86 = arith.constant 0.000000e+00 : f32
      %100 = vector.broadcast %cst_86 : f32 to vector<8x128xf32>
      %c0_87 = arith.constant 0 : index
      %c0_88 = arith.constant 0 : index
      %c0_89 = arith.constant 0 : index
      %c0_90 = arith.constant 0 : index
      %101 = vector.load %arg9[%c0_87, %c0_88, %c0_89, %c0_90] : memref<1x1x8x128xf32, #tpu.memory_space<vmem>>, vector<1x1x8x128xf32>
      %102 = vector.shape_cast %101 : vector<1x1x8x128xf32> to vector<8x128xf32>
      %103 = vector.shape_cast %100 : vector<8x128xf32> to vector<1x1x8x128xf32>
      tpu.vector_store %arg9[%c0_87, %c0_88, %c0_89, %c0_90], %103 {strides = array<i32>} : memref<1x1x8x128xf32, #tpu.memory_space<vmem>>, vector<1x1x8x128xf32>,
    } else {
    }
    %c0 = arith.constant 0 : index
    %c0_1 = arith.constant 0 : index
    %c0_2 = arith.constant 0 : index
    %c0_3 = arith.constant 0 : index
    %3 = vector.load %arg3[%c0, %c0_1, %c0_2, %c0_3] : memref<1x4x8x128xf32, #tpu.memory_space<vmem>>, vector<1x4x8x128xf32>
    %4 = vector.shape_cast %3 : vector<1x4x8x128xf32> to vector<4x8x128xf32>
    %c0_4 = arith.constant 0 : index
    %c0_5 = arith.constant 0 : index
    %c0_6 = arith.constant 0 : index
    %c0_7 = arith.constant 0 : index
    %5 = vector.load %arg4[%c0_4, %c0_5, %c0_6, %c0_7] : memref<1x1x8x128xi32, #tpu.memory_space<vmem>>, vector<1x1x8x128xi32>
    %6 = vector.shape_cast %5 : vector<1x1x8x128xi32> to vector<1x8x128xi32>
    %cst = arith.constant dense<0xFF800000> : vector<8x128xf32>
    %7 = vector.multi_reduction <maximumf>, %4, %cst [0] : vector<4x8x128xf32> to vector<8x128xf32>
    %8 = vector.shape_cast %7 : vector<8x128xf32> to vector<1x8x128xf32>
    %9 = vector.broadcast %8 : vector<1x8x128xf32> to vector<4x8x128xf32>
    %10 = arith.subf %4, %9 : vector<4x8x128xf32>
    %11 = math.exp %10 : vector<4x8x128xf32>
    %cst_8 = arith.constant dense<0.000000e+00> : vector<8x128xf32>
    %12 = vector.multi_reduction <add>, %11, %cst_8 [0] : vector<4x8x128xf32> to vector<8x128xf32>
    %13 = vector.shape_cast %12 : vector<8x128xf32> to vector<1x8x128xf32>
    %14 = tpu.reciprocal %13 : vector<1x8x128xf32> -> vector<1x8x128xf32>
    %15 = vector.broadcast %14 : vector<1x8x128xf32> to vector<4x8x128xf32>
    %16 = arith.mulf %11, %15 : vector<4x8x128xf32>
    %17 = tpu.iota {dimensions = array<i32: 0>} : vector<4x8x128xi32>
    %18 = vector.broadcast %6 : vector<1x8x128xi32> to vector<4x8x128xi32>
    %19 = arith.cmpi eq, %17, %18 : vector<4x8x128xi32>
    %20 = arith.extui %19 : vector<4x8x128xi1> to vector<4x8x128xi32>
    %21 = arith.sitofp %20 : vector<4x8x128xi32> to vector<4x8x128xf32>
    %22 = arith.mulf %16, %21 : vector<4x8x128xf32>
    %c0_i32_9 = arith.constant 0 : i32
    %23 = vector.broadcast %c0_i32_9 : i32 to vector<1x8x128xi32>
    %24 = arith.cmpi sge, %6, %23 : vector<1x8x128xi32>
    %25 = arith.extui %24 : vector<1x8x128xi1> to vector<1x8x128xi32>
    %26 = arith.sitofp %25 : vector<1x8x128xi32> to vector<1x8x128xf32>
    %27 = vector.broadcast %26 : vector<1x8x128xf32> to vector<4x8x128xf32>
    %28 = arith.mulf %16, %27 : vector<4x8x128xf32>
    %c0_10 = arith.constant 0 : index
    %c0_11 = arith.constant 0 : index
    %c0_12 = arith.constant 0 : index
    %c0_13 = arith.constant 0 : index
    %c0_14 = arith.constant 0 : index
    %29 = vector.load %arg5[%c0_10, %c0_11, %c0_12, %c0_13, %c0_14] : memref<1x1x4x8x128xf32, #tpu.memory_space<vmem>>, vector<1x1x4x8x128xf32>
    %30 = vector.shape_cast %29 : vector<1x1x4x8x128xf32> to vector<4x8x128xf32>
    %31 = arith.addf %30, %22 : vector<4x8x128xf32>
    %c0_15 = arith.constant 0 : index
    %c0_16 = arith.constant 0 : index
    %c0_17 = arith.constant 0 : index
    %c0_18 = arith.constant 0 : index
    %c0_19 = arith.constant 0 : index
    %32 = vector.load %arg5[%c0_15, %c0_16, %c0_17, %c0_18, %c0_19] : memref<1x1x4x8x128xf32, #tpu.memory_space<vmem>>, vector<1x1x4x8x128xf32>
    %33 = vector.shape_cast %32 : vector<1x1x4x8x128xf32> to vector<4x8x128xf32>
    %34 = vector.shape_cast %31 : vector<4x8x128xf32> to vector<1x1x4x8x128xf32>
    tpu.vector_store %arg5[%c0_15, %c0_16, %c0_17, %c0_18, %c0_19], %34 {strides = array<i32>} : memref<1x1x4x8x128xf32, #tpu.memory_space<vmem>>, vector<1x1x4x8x128xf32>,
    %c0_20 = arith.constant 0 : index
    %c0_21 = arith.constant 0 : index
    %c0_22 = arith.constant 0 : index
    %c0_23 = arith.constant 0 : index
    %c0_24 = arith.constant 0 : index
    %35 = vector.load %arg6[%c0_20, %c0_21, %c0_22, %c0_23, %c0_24] : memref<1x1x4x8x128xf32, #tpu.memory_space<vmem>>, vector<1x1x4x8x128xf32>
    %36 = vector.shape_cast %35 : vector<1x1x4x8x128xf32> to vector<4x8x128xf32>
    %37 = arith.addf %36, %28 : vector<4x8x128xf32>
    %c0_25 = arith.constant 0 : index
    %c0_26 = arith.constant 0 : index
    %c0_27 = arith.constant 0 : index
    %c0_28 = arith.constant 0 : index
    %c0_29 = arith.constant 0 : index
    %38 = vector.load %arg6[%c0_25, %c0_26, %c0_27, %c0_28, %c0_29] : memref<1x1x4x8x128xf32, #tpu.memory_space<vmem>>, vector<1x1x4x8x128xf32>
    %39 = vector.shape_cast %38 : vector<1x1x4x8x128xf32> to vector<4x8x128xf32>
    %40 = vector.shape_cast %37 : vector<4x8x128xf32> to vector<1x1x4x8x128xf32>
    tpu.vector_store %arg6[%c0_25, %c0_26, %c0_27, %c0_28, %c0_29], %40 {strides = array<i32>} : memref<1x1x4x8x128xf32, #tpu.memory_space<vmem>>, vector<1x1x4x8x128xf32>,
    %c0_30 = arith.constant 0 : index
    %c0_31 = arith.constant 0 : index
    %c0_32 = arith.constant 0 : index
    %c0_33 = arith.constant 0 : index
    %c0_34 = arith.constant 0 : index
    %41 = vector.load %arg7[%c0_30, %c0_31, %c0_32, %c0_33, %c0_34] : memref<1x1x4x8x128xf32, #tpu.memory_space<vmem>>, vector<1x1x4x8x128xf32>
    %42 = vector.shape_cast %41 : vector<1x1x4x8x128xf32> to vector<4x8x128xf32>
    %43 = arith.addf %42, %21 : vector<4x8x128xf32>
    %c0_35 = arith.constant 0 : index
    %c0_36 = arith.constant 0 : index
    %c0_37 = arith.constant 0 : index
    %c0_38 = arith.constant 0 : index
    %c0_39 = arith.constant 0 : index
    %44 = vector.load %arg7[%c0_35, %c0_36, %c0_37, %c0_38, %c0_39] : memref<1x1x4x8x128xf32, #tpu.memory_space<vmem>>, vector<1x1x4x8x128xf32>
    %45 = vector.shape_cast %44 : vector<1x1x4x8x128xf32> to vector<4x8x128xf32>
    %46 = vector.shape_cast %43 : vector<4x8x128xf32> to vector<1x1x4x8x128xf32>
    tpu.vector_store %arg7[%c0_35, %c0_36, %c0_37, %c0_38, %c0_39], %46 {strides = array<i32>} : memref<1x1x4x8x128xf32, #tpu.memory_space<vmem>>, vector<1x1x4x8x128xf32>,
    %47 = arith.mulf %21, %4 : vector<4x8x128xf32>
    %cst_40 = arith.constant dense<0.000000e+00> : vector<8x128xf32>
    %48 = vector.multi_reduction <add>, %47, %cst_40 [0] : vector<4x8x128xf32> to vector<8x128xf32>
    %49 = vector.shape_cast %48 : vector<8x128xf32> to vector<1x8x128xf32>
    %50 = math.log %13 : vector<1x8x128xf32>
    %51 = arith.addf %50, %8 : vector<1x8x128xf32>
    %52 = arith.subf %51, %49 : vector<1x8x128xf32>
    %cst_41 = arith.constant dense<0.000000e+00> : vector<8x128xf32>
    %53 = vector.multi_reduction <add>, %22, %cst_41 [0] : vector<4x8x128xf32> to vector<8x128xf32>
    %54 = vector.shape_cast %53 : vector<8x128xf32> to vector<1x8x128xf32>
    %cst_42 = arith.constant 0.999986648 : f32
    %55 = vector.broadcast %cst_42 : f32 to vector<1x8x128xf32>
    %56 = arith.mulf %55, %54 : vector<1x8x128xf32>
    %cst_43 = arith.constant 3.33333332E-6 : f32
    %57 = vector.broadcast %cst_43 : f32 to vector<1x8x128xf32>
    %58 = arith.addf %57, %56 : vector<1x8x128xf32>
    %cst_44 = arith.constant 9.99999974E-6 : f32
    %59 = vector.broadcast %cst_44 : f32 to vector<1x8x128xf32>
    %60 = arith.addf %58, %59 : vector<1x8x128xf32>
    %cst_45 = arith.constant 1.000000e+00 : f32
    %61 = vector.broadcast %cst_45 : f32 to vector<1x8x128xf32>
    %62 = arith.subf %61, %60 : vector<1x8x128xf32>
    %63 = arith.mulf %62, %62 : vector<1x8x128xf32>
    %cst_46 = arith.constant 0.000000e+00 : f32
    %64 = vector.broadcast %cst_46 : f32 to vector<1x8x128xf32>
    %65 = arith.subf %64, %63 : vector<1x8x128xf32>
    %66 = math.log %60 : vector<1x8x128xf32>
    %67 = arith.mulf %65, %66 : vector<1x8x128xf32>
    %68 = arith.mulf %52, %26 : vector<1x8x128xf32>
    %69 = arith.mulf %67, %26 : vector<1x8x128xf32>
    %c0_47 = arith.constant 0 : index
    %c0_48 = arith.constant 0 : index
    %c0_49 = arith.constant 0 : index
    %c0_50 = arith.constant 0 : index
    %70 = vector.load %arg8[%c0_47, %c0_48, %c0_49, %c0_50] : memref<1x1x8x128xf32, #tpu.memory_space<vmem>>, vector<1x1x8x128xf32>
    %71 = vector.shape_cast %70 : vector<1x1x8x128xf32> to vector<8x128xf32>
    %72 = vector.shape_cast %68 : vector<1x8x128xf32> to vector<8x128xf32>
    %73 = arith.addf %71, %72 : vector<8x128xf32>
    %c0_51 = arith.constant 0 : index
    %c0_52 = arith.constant 0 : index
    %c0_53 = arith.constant 0 : index
    %c0_54 = arith.constant 0 : index
    %74 = vector.load %arg8[%c0_51, %c0_52, %c0_53, %c0_54] : memref<1x1x8x128xf32, #tpu.memory_space<vmem>>, vector<1x1x8x128xf32>
    %75 = vector.shape_cast %74 : vector<1x1x8x128xf32> to vector<8x128xf32>
    %76 = vector.shape_cast %73 : vector<8x128xf32> to vector<1x1x8x128xf32>
    tpu.vector_store %arg8[%c0_51, %c0_52, %c0_53, %c0_54], %76 {strides = array<i32>} : memref<1x1x8x128xf32, #tpu.memory_space<vmem>>, vector<1x1x8x128xf32>,
    %c0_55 = arith.constant 0 : index
    %c0_56 = arith.constant 0 : index
    %c0_57 = arith.constant 0 : index
    %c0_58 = arith.constant 0 : index
    %77 = vector.load %arg9[%c0_55, %c0_56, %c0_57, %c0_58] : memref<1x1x8x128xf32, #tpu.memory_space<vmem>>, vector<1x1x8x128xf32>
    %78 = vector.shape_cast %77 : vector<1x1x8x128xf32> to vector<8x128xf32>
    %79 = vector.shape_cast %69 : vector<1x8x128xf32> to vector<8x128xf32>
    %80 = arith.addf %78, %79 : vector<8x128xf32>
    %c0_59 = arith.constant 0 : index
    %c0_60 = arith.constant 0 : index
    %c0_61 = arith.constant 0 : index
    %c0_62 = arith.constant 0 : index
    %81 = vector.load %arg9[%c0_59, %c0_60, %c0_61, %c0_62] : memref<1x1x8x128xf32, #tpu.memory_space<vmem>>, vector<1x1x8x128xf32>
    %82 = vector.shape_cast %81 : vector<1x1x8x128xf32> to vector<8x128xf32>
    %83 = vector.shape_cast %80 : vector<8x128xf32> to vector<1x1x8x128xf32>
    tpu.vector_store %arg9[%c0_59, %c0_60, %c0_61, %c0_62], %83 {strides = array<i32>} : memref<1x1x8x128xf32, #tpu.memory_space<vmem>>, vector<1x1x8x128xf32>,
    return
  }
  func.func @transform_0(%arg0: i32, %arg1: i32, %arg2: i32) -> (i32, i32, i32, i32) {
    %c1_i32 = arith.constant 1 : i32
    %0 = arith.muli %arg0, %c1_i32 : i32
    %1 = arith.addi %0, %arg2 : i32
    %c0_i32 = arith.constant 0 : i32
    %c0_i32_0 = arith.constant 0 : i32
    %c0_i32_1 = arith.constant 0 : i32
    return %arg1, %c0_i32, %1, %c0_i32_0 : i32, i32, i32, i32
  }
  func.func @transform_1(%arg0: i32, %arg1: i32, %arg2: i32) -> (i32, i32, i32, i32) {
    %c1_i32 = arith.constant 1 : i32
    %0 = arith.muli %arg0, %c1_i32 : i32
    %1 = arith.addi %0, %arg2 : i32
    %c0_i32 = arith.constant 0 : i32
    %c0_i32_0 = arith.constant 0 : i32
    %c0_i32_1 = arith.constant 0 : i32
    return %arg1, %c0_i32, %1, %c0_i32_0 : i32, i32, i32, i32
  }
  func.func @transform_2(%arg0: i32, %arg1: i32, %arg2: i32) -> (i32, i32, i32, i32, i32) {
    %c0_i32 = arith.constant 0 : i32
    %c0_i32_0 = arith.constant 0 : i32
    %c0_i32_1 = arith.constant 0 : i32
    %c0_i32_2 = arith.constant 0 : i32
    return %arg0, %arg1, %c0_i32, %c0_i32_0, %c0_i32_1 : i32, i32, i32, i32, i32
  }
  func.func @transform_3(%arg0: i32, %arg1: i32, %arg2: i32) -> (i32, i32, i32, i32, i32) {
    %c0_i32 = arith.constant 0 : i32
    %c0_i32_0 = arith.constant 0 : i32
    %c0_i32_1 = arith.constant 0 : i32
    %c0_i32_2 = arith.constant 0 : i32
    return %arg0, %arg1, %c0_i32, %c0_i32_0, %c0_i32_1 : i32, i32, i32, i32, i32
  }
  func.func @transform_4(%arg0: i32, %arg1: i32, %arg2: i32) -> (i32, i32, i32, i32, i32) {
    %c0_i32 = arith.constant 0 : i32
    %c0_i32_0 = arith.constant 0 : i32
    %c0_i32_1 = arith.constant 0 : i32
    %c0_i32_2 = arith.constant 0 : i32
    return %arg0, %arg1, %c0_i32, %c0_i32_0, %c0_i32_1 : i32, i32, i32, i32, i32
  }
  func.func @transform_5(%arg0: i32, %arg1: i32, %arg2: i32) -> (i32, i32, i32, i32) {
    %c0_i32 = arith.constant 0 : i32
    %c0_i32_0 = arith.constant 0 : i32
    %c0_i32_1 = arith.constant 0 : i32
    return %arg0, %arg1, %c0_i32, %c0_i32_0 : i32, i32, i32, i32
  }
  func.func @transform_6(%arg0: i32, %arg1: i32, %arg2: i32) -> (i32, i32, i32, i32) {
    %c0_i32 = arith.constant 0 : i32
    %c0_i32_0 = arith.constant 0 : i32
    %c0_i32_1 = arith.constant 0 : i32
    return %arg0, %arg1, %c0_i32, %c0_i32_0 : i32, i32, i32, i32
  }
}

</mosaic_0001>

<llo_original>
// kernel: tpu_custom_call.1
$region0: #{tpu_custom_call.1}
  #allocation0 [shape = 'u32[]', space=smem, size = 0x4, offset = 0x4, fixed_abs, tag = 'smem constant byte address 0x4 - core index']
  #allocation1 [shape = 'u32[144,128]{1,0:T(1,128)}', space=vmem, size = 0x12000, scoped, tag = 'internal scratch']
  %s0 = inlined_call_operand.hbm [shape: f32[2,4,16,128], index: 0, kind: input, shape index: {}]
  %s1 = inlined_call_operand.hbm [shape: s32[2,1,16,128], index: 1, kind: input, shape index: {}]
  %s2 = inlined_call_operand.hbm [shape: f32[2,2,4,8,128], index: 2, kind: output, shape index: {0}]
  %s3 = inlined_call_operand.hbm [shape: f32[2,2,4,8,128], index: 3, kind: output, shape index: {1}]
  %s4 = inlined_call_operand.hbm [shape: f32[2,2,4,8,128], index: 4, kind: output, shape index: {2}]
  %s5 = inlined_call_operand.hbm [shape: f32[2,2,8,128], index: 5, kind: output, shape index: {3}]
  %s6 = inlined_call_operand.hbm [shape: f32[2,2,8,128], index: 6, kind: output, shape index: {4}]
  %7 = xla_tuple %s2, %s3, %s4, %s5, %s6
  %s8 = sld [smem:[#allocation0]]
  $region85: #{tpu_custom_call.1} parent=0
    _
  %s10 = ssub.s32 1, %s8
  %s11 = scalar_select 0, %s10, %s8
  $region1: #{tpu_custom_call.1} parent=0
    #allocation2 [shape = 'u8[32768]{0}', space=vmem, size = 0x8000, scoped, tag = 'input window, operand 0']
    #allocation3 [shape = 's32[2]{0}', space=sflag, size = 0x8, scoped, tag = 'scoped memory for tpu_custom_call.1']
    #allocation4 [shape = 's32[2]{0}', space=sflag, size = 0x8, scoped, tag = 'scoped memory for tpu_custom_call.1']
    #allocation5 [shape = 'u8[8192]{0}', space=vmem, size = 0x2000, scoped, tag = 'input window, operand 1']
    #allocation6 [shape = 's32[2]{0}', space=sflag, size = 0x8, scoped, tag = 'scoped memory for tpu_custom_call.1']
    #allocation7 [shape = 'u8[32768]{0}', space=vmem, size = 0x8000, scoped, tag = 'output window, operand 0']
    #allocation8 [shape = 'u8[32768]{0}', space=vmem, size = 0x8000, scoped, tag = 'output window, operand 1']
    #allocation9 [shape = 's32[2]{0}', space=sflag, size = 0x8, scoped, tag = 'scoped memory for tpu_custom_call.1']
    #allocation10 [shape = 'u8[32768]{0}', space=vmem, size = 0x8000, scoped, tag = 'output window, operand 2']
    #allocation11 [shape = 'u8[8192]{0}', space=vmem, size = 0x2000, scoped, tag = 'output window, operand 3']
    #allocation12 [shape = 's32[2]{0}', space=sflag, size = 0x8, scoped, tag = 'scoped memory for tpu_custom_call.1']
    #allocation13 [shape = 'u8[8192]{0}', space=vmem, size = 0x2000, scoped, tag = 'output window, operand 4']
    %12 = vsyncpa [#allocation3], 0
    %s13 = scalar_lea.sflag [#allocation3], 1
    %14 = vsyncpa %s13, 0
    %15 = vsyncpa [#allocation6], 0
    %s16 = scalar_lea.sflag [#allocation6], 1
    %17 = vsyncpa %s16, 0
    %18 = vsyncpa [#allocation4], 0
    %s19 = scalar_lea.sflag [#allocation4], 1
    %20 = vsyncpa %s19, 0
    %21 = vsyncpa [#allocation9], 0
    %s22 = scalar_lea.sflag [#allocation9], 1
    %23 = vsyncpa %s22, 0
    %24 = vsyncpa [#allocation12], 0
    %s25 = scalar_lea.sflag [#allocation12], 1
    %26 = vsyncpa %s25, 0
    loop: start=0, step=1, limit=6
    $region2: #{tpu_custom_call.1} parent=1 // loop_pre_header
      _
    $region3: #{tpu_custom_call.1} parent=1 // loop_header
      %s28 = sphi 0, %s32
      %p29 = scmp.ge.s32.totalorder %s28, 6
      %s35 = sphi 0, %s54
      %s36 = sphi 0, %s50
      %s37 = sphi 0, %s46
      %s38 = sphi 0, %s35
      %s39 = sphi 0, %s36
      %s40 = sphi 0, %s37
      %s41 = sphi 0, %s38
      %s42 = sphi 0, %s39
      %s43 = sphi 0, %s40
      %s61 = sphi 0, %s63
      %s64 = sphi 0, %s61
      %s65 = sphi 0, %s64
      %s81 = sphi 0, %s65
      %s91 = sphi 0, %s93
      %s94 = sphi 0, %s91
      %s95 = sphi 0, %s94
      %s111 = sphi 0, %s95
      %s119 = sphi 0, %s121
      %s122 = sphi 0, %s119
      %s123 = sphi 0, %s122
      %s139 = sphi 0, %s123
      %s147 = sphi 0, %s149
      %s150 = sphi 0, %s147
      %s151 = sphi 0, %s150
      %s167 = sphi 0, %s151
      %s175 = sphi 0, %s177
      %s178 = sphi 0, %s175
      %s179 = sphi 0, %s178
      %s195 = sphi 0, %s179
      %s203 = sphi 0, %s205
      %s206 = sphi 0, %s203
      %s207 = sphi 0, %s206
      %s223 = sphi 0, %s207
      %s231 = sphi 0, %s233
      %s234 = sphi 0, %s231
      %s235 = sphi 0, %s234
      %s251 = sphi 0, %s235
    $region4: #{tpu_custom_call.1} parent=1 // loop_header_branch
      %31 = sbr.rel (%p29) target = $region8
    $region5: #{tpu_custom_call.1} parent=1 // loop_body
      %s33 = ssub.s32 %s28, 1
      %s34 = ssub.s32 %s28, 2
      %s44 = sadd.s32 1, %s37
      %p45 = scmp.ge.s32.totalorder %s44, 1
      %s46 = scalar_select %p45, 0, %s44
      %s47 = sadd.s32 1, %s36
      %s48 = scalar_select %p45, %s47, %s36
      %p49 = scmp.ge.s32.totalorder %s48, 2
      %s50 = scalar_select %p49, 0, %s48
      %s51 = sadd.s32 1, %s35
      %s52 = scalar_select %p49, %s51, %s35
      %p53 = scmp.ge.s32.totalorder %s52, 2
      %s54 = scalar_select %p53, 0, %s52
      %s55 = sadd.s32 %s35, %s37
      %s56 = sadd.s32 %s54, %s46
      %s57 = ssub.s32 %s36, %s50
      %s58 = ssub.s32 %s55, %s56
      %s59 = sor.u32 %s57, %s58
      %p60 = scmp.eq.s32.totalorder %s59, 0
      %s62 = sadd.s32 %s61, 1
      %s63 = scalar_select %p60, %s61, %s62
      %p66 = pneg %p60
      %p67 = scmp.eq.s32.totalorder %s28, 3
      %p68 = por %p66, %p67
      %p69 = scmp.ne.s32.totalorder %s61, %s64
      %p70 = scmp.eq.s32.totalorder %s28, 0
      %p71 = por %p69, %p70
      %p72 = scmp.ne.s32.totalorder %s61, %s64
      %p73 = scmp.eq.s32.totalorder %s33, 3
      %p74 = por %p72, %p73
      %p75 = scmp.ne.s32.totalorder %s64, %s65
      %p76 = scmp.eq.s32.totalorder %s33, 0
      %p77 = por %p75, %p76
      %p78 = scmp.ne.s32.totalorder %s64, %s65
      %p79 = scmp.eq.s32.totalorder %s34, 3
      %p80 = por %p78, %p79
      %p82 = scmp.ne.s32.totalorder %s65, %s81
      %p83 = scmp.eq.s32.totalorder %s34, 0
      %p84 = por %p82, %p83
      %s85 = sadd.s32 %s35, %s37
      %s86 = sadd.s32 %s54, %s46
      %s87 = ssub.s32 %s36, %s50
      %s88 = ssub.s32 %s85, %s86
      %s89 = sor.u32 %s87, %s88
      %p90 = scmp.eq.s32.totalorder %s89, 0
      %s92 = sadd.s32 %s91, 1
      %s93 = scalar_select %p90, %s91, %s92
      %p96 = pneg %p90
      %p97 = scmp.eq.s32.totalorder %s28, 3
      %p98 = por %p96, %p97
      %p99 = scmp.ne.s32.totalorder %s91, %s94
      %p100 = scmp.eq.s32.totalorder %s28, 0
      %p101 = por %p99, %p100
      %p102 = scmp.ne.s32.totalorder %s91, %s94
      %p103 = scmp.eq.s32.totalorder %s33, 3
      %p104 = por %p102, %p103
      %p105 = scmp.ne.s32.totalorder %s94, %s95
      %p106 = scmp.eq.s32.totalorder %s33, 0
      %p107 = por %p105, %p106
      %p108 = scmp.ne.s32.totalorder %s94, %s95
      %p109 = scmp.eq.s32.totalorder %s34, 3
      %p110 = por %p108, %p109
      %p112 = scmp.ne.s32.totalorder %s95, %s111
      %p113 = scmp.eq.s32.totalorder %s34, 0
      %p114 = por %p112, %p113
      %s115 = ssub.s32 %s35, %s54
      %s116 = ssub.s32 %s36, %s50
      %s117 = sor.u32 %s115, %s116
      %p118 = scmp.eq.s32.totalorder %s117, 0
      %s120 = sadd.s32 %s119, 1
      %s121 = scalar_select %p118, %s119, %s120
      %p124 = pneg %p118
      %p125 = scmp.eq.s32.totalorder %s28, 3
      %p126 = por %p124, %p125
      %p127 = scmp.ne.s32.totalorder %s119, %s122
      %p128 = scmp.eq.s32.totalorder %s28, 0
      %p129 = por %p127, %p128
      %p130 = scmp.ne.s32.totalorder %s119, %s122
      %p131 = scmp.eq.s32.totalorder %s33, 3
      %p132 = por %p130, %p131
      %p133 = scmp.ne.s32.totalorder %s122, %s123
      %p134 = scmp.eq.s32.totalorder %s33, 0
      %p135 = por %p133, %p134
      %p136 = scmp.ne.s32.totalorder %s122, %s123
      %p137 = scmp.eq.s32.totalorder %s34, 3
      %p138 = por %p136, %p137
      %p140 = scmp.ne.s32.totalorder %s123, %s139
      %p141 = scmp.eq.s32.totalorder %s34, 0
      %p142 = por %p140, %p141
      %s143 = ssub.s32 %s35, %s54
      %s144 = ssub.s32 %s36, %s50
      %s145 = sor.u32 %s143, %s144
      %p146 = scmp.eq.s32.totalorder %s145, 0
      %s148 = sadd.s32 %s147, 1
      %s149 = scalar_select %p146, %s147, %s148
      %p152 = pneg %p146
      %p153 = scmp.eq.s32.totalorder %s28, 3
      %p154 = por %p152, %p153
      %p155 = scmp.ne.s32.totalorder %s147, %s150
      %p156 = scmp.eq.s32.totalorder %s28, 0
      %p157 = por %p155, %p156
      %p158 = scmp.ne.s32.totalorder %s147, %s150
      %p159 = scmp.eq.s32.totalorder %s33, 3
      %p160 = por %p158, %p159
      %p161 = scmp.ne.s32.totalorder %s150, %s151
      %p162 = scmp.eq.s32.totalorder %s33, 0
      %p163 = por %p161, %p162
      %p164 = scmp.ne.s32.totalorder %s150, %s151
      %p165 = scmp.eq.s32.totalorder %s34, 3
      %p166 = por %p164, %p165
      %p168 = scmp.ne.s32.totalorder %s151, %s167
      %p169 = scmp.eq.s32.totalorder %s34, 0
      %p170 = por %p168, %p169
      %s171 = ssub.s32 %s35, %s54
      %s172 = ssub.s32 %s36, %s50
      %s173 = sor.u32 %s171, %s172
      %p174 = scmp.eq.s32.totalorder %s173, 0
      %s176 = sadd.s32 %s175, 1
      %s177 = scalar_select %p174, %s175, %s176
      %p180 = pneg %p174
      %p181 = scmp.eq.s32.totalorder %s28, 3
      %p182 = por %p180, %p181
      %p183 = scmp.ne.s32.totalorder %s175, %s178
      %p184 = scmp.eq.s32.totalorder %s28, 0
      %p185 = por %p183, %p184
      %p186 = scmp.ne.s32.totalorder %s175, %s178
      %p187 = scmp.eq.s32.totalorder %s33, 3
      %p188 = por %p186, %p187
      %p189 = scmp.ne.s32.totalorder %s178, %s179
      %p190 = scmp.eq.s32.totalorder %s33, 0
      %p191 = por %p189, %p190
      %p192 = scmp.ne.s32.totalorder %s178, %s179
      %p193 = scmp.eq.s32.totalorder %s34, 3
      %p194 = por %p192, %p193
      %p196 = scmp.ne.s32.totalorder %s179, %s195
      %p197 = scmp.eq.s32.totalorder %s34, 0
      %p198 = por %p196, %p197
      %s199 = ssub.s32 %s35, %s54
      %s200 = ssub.s32 %s36, %s50
      %s201 = sor.u32 %s199, %s200
      %p202 = scmp.eq.s32.totalorder %s201, 0
      %s204 = sadd.s32 %s203, 1
      %s205 = scalar_select %p202, %s203, %s204
      %p208 = pneg %p202
      %p209 = scmp.eq.s32.totalorder %s28, 3
      %p210 = por %p208, %p209
      %p211 = scmp.ne.s32.totalorder %s203, %s206
      %p212 = scmp.eq.s32.totalorder %s28, 0
      %p213 = por %p211, %p212
      %p214 = scmp.ne.s32.totalorder %s203, %s206
      %p215 = scmp.eq.s32.totalorder %s33, 3
      %p216 = por %p214, %p215
      %p217 = scmp.ne.s32.totalorder %s206, %s207
      %p218 = scmp.eq.s32.totalorder %s33, 0
      %p219 = por %p217, %p218
      %p220 = scmp.ne.s32.totalorder %s206, %s207
      %p221 = scmp.eq.s32.totalorder %s34, 3
      %p222 = por %p220, %p221
      %p224 = scmp.ne.s32.totalorder %s207, %s223
      %p225 = scmp.eq.s32.totalorder %s34, 0
      %p226 = por %p224, %p225
      %s227 = ssub.s32 %s35, %s54
      %s228 = ssub.s32 %s36, %s50
      %s229 = sor.u32 %s227, %s228
      %p230 = scmp.eq.s32.totalorder %s229, 0
      %s232 = sadd.s32 %s231, 1
      %s233 = scalar_select %p230, %s231, %s232
      %p236 = pneg %p230
      %p237 = scmp.eq.s32.totalorder %s28, 3
      %p238 = por %p236, %p237
      %p239 = scmp.ne.s32.totalorder %s231, %s234
      %p240 = scmp.eq.s32.totalorder %s28, 0
      %p241 = por %p239, %p240
      %p242 = scmp.ne.s32.totalorder %s231, %s234
      %p243 = scmp.eq.s32.totalorder %s33, 3
      %p244 = por %p242, %p243
      %p245 = scmp.ne.s32.totalorder %s234, %s235
      %p246 = scmp.eq.s32.totalorder %s33, 0
      %p247 = por %p245, %p246
      %p248 = scmp.ne.s32.totalorder %s234, %s235
      %p249 = scmp.eq.s32.totalorder %s34, 3
      %p250 = por %p248, %p249
      %p252 = scmp.ne.s32.totalorder %s235, %s251
      %p253 = scmp.eq.s32.totalorder %s34, 0
      %p254 = por %p252, %p253
      %p255 = scmp.le.s32.totalorder 1, %s28
      %p256 = scmp.lt.s32.totalorder %s28, 5
      %p257 = pnand %p255, %p256
      %p258 = pneg %p257
      // Predicated region
      $region9: #{tpu_custom_call.1} parent=5 // pred_check
        _
      $region10: #{tpu_custom_call.1} parent=5 // pred_check_branch
        %260 = sbr.rel (%p257) target = $region12
      $region11: #{tpu_custom_call.1} parent=5 // pred_region
        %s261 = ssub.s32 %s28, 1
      $region12: #{tpu_custom_call.1} parent=5 // pred_fallthru
        _
      %p262 = scmp.lt.s32.totalorder %s28, 4
      // Predicated region
      $region13: #{tpu_custom_call.1} parent=5 // pred_check
        %p263 = pneg %p262
      $region14: #{tpu_custom_call.1} parent=5 // pred_check_branch
        %265 = sbr.rel (%p263) target = $region16
      $region15: #{tpu_custom_call.1} parent=5 // pred_region
        // Predicated region
        $region17: #{tpu_custom_call.1} parent=15 // pred_check
          %p266 = pneg %p71
        $region18: #{tpu_custom_call.1} parent=15 // pred_check_branch
          %268 = sbr.rel (%p266) target = $region20
        $region19: #{tpu_custom_call.1} parent=15 // pred_region
          %s269 = sand.u32 %s61, 1
          %s270 = scalar_lea.sflag [#allocation3], %s269
          %s271 = sand.u32 %s61, 1
          %s272 = smul.addr %s271, 32
          %s273 = scalar_lea.vmem [#allocation2], %s272
          %s274 = sadd.s32 %s35, %s37
          %s276 = ssub.s32 512, 512
          %277 = vsyncadd %s270, %s276
          %s278 = smul.addr %s36, 8
          %s279 = sadd.s32 %s274, %s278
          %s280 = smul.addr %s279, 128
          %s281 = scalar_lea.hbm %s0, %s280
          %s282 = sshll.u32 %s273, 4
          %s283 = int_to_ptr.vmem [resolvable:$true] %s282
          %288 = dma.hbm_to_vmem [thread:$0]  %s281, 512, %s283, %s270, 256, 128, 8
        $region20: #{tpu_custom_call.1} parent=15 // pred_fallthru
          _
        // Predicated region
        $region21: #{tpu_custom_call.1} parent=15 // pred_check
          %p289 = pneg %p101
        $region22: #{tpu_custom_call.1} parent=15 // pred_check_branch
          %291 = sbr.rel (%p289) target = $region24
        $region23: #{tpu_custom_call.1} parent=15 // pred_region
          %s292 = sand.u32 %s91, 1
          %s293 = scalar_lea.sflag [#allocation6], %s292
          %s294 = sand.u32 %s91, 1
          %s295 = smul.addr %s294, 8
          %s296 = scalar_lea.vmem [#allocation5], %s295
          %s297 = sadd.s32 %s35, %s37
          %s299 = ssub.s32 128, 128
          %300 = vsyncadd %s293, %s299
          %s301 = smul.addr %s36, 2
          %s302 = sadd.s32 %s297, %s301
          %s303 = smul.addr %s302, 128
          %s304 = scalar_lea.hbm %s1, %s303
          %s306 = sshll.u32 %s296, 4
          %s307 = int_to_ptr.vmem [resolvable:$true] %s306
          %309 = dma.hbm_to_vmem [thread:$0]  %s304, 128, %s307, %s293
        $region24: #{tpu_custom_call.1} parent=15 // pred_fallthru
          _
      $region16: #{tpu_custom_call.1} parent=5 // pred_fallthru
        _
      %p310 = scmp.le.s32.totalorder 1, %s28
      %p311 = scmp.lt.s32.totalorder %s28, 5
      %p312 = pnand %p310, %p311
      %p313 = pneg %p312
      // Predicated region
      $region25: #{tpu_custom_call.1} parent=5 // pred_check
        _
      $region26: #{tpu_custom_call.1} parent=5 // pred_check_branch
        %315 = sbr.rel (%p312) target = $region28
      $region27: #{tpu_custom_call.1} parent=5 // pred_region
        %s316 = ssub.s32 %s28, 1
        %s317 = sand.u32 %s64, 1
        %s318 = scalar_lea.sflag [#allocation3], %s317
        %s319 = sand.u32 %s64, 1
        %s320 = smul.addr %s319, 32
        %s321 = scalar_lea.vmem [#allocation2], %s320
        // Predicated region
        $region29: #{tpu_custom_call.1} parent=27 // pred_check
          %p322 = pneg %p77
        $region30: #{tpu_custom_call.1} parent=27 // pred_check_branch
          %324 = sbr.rel (%p322) target = $region32
        $region31: #{tpu_custom_call.1} parent=27 // pred_region
          %325 = dma.done %s318, 512
        $region32: #{tpu_custom_call.1} parent=27 // pred_fallthru
          _
        %s326 = sand.u32 %s94, 1
        %s327 = scalar_lea.sflag [#allocation6], %s326
        %s328 = sand.u32 %s94, 1
        %s329 = smul.addr %s328, 8
        %s330 = scalar_lea.vmem [#allocation5], %s329
        // Predicated region
        $region33: #{tpu_custom_call.1} parent=27 // pred_check
          %p331 = pneg %p107
        $region34: #{tpu_custom_call.1} parent=27 // pred_check_branch
          %333 = sbr.rel (%p331) target = $region36
        $region35: #{tpu_custom_call.1} parent=27 // pred_region
          %334 = dma.done %s327, 128
        $region36: #{tpu_custom_call.1} parent=27 // pred_fallthru
          _
        %s335 = sand.u32 %s64, 1
        %s336 = scalar_lea.sflag [#allocation3], %s335
        %s337 = sand.u32 %s64, 1
        %s338 = smul.addr %s337, 32
        %s339 = scalar_lea.vmem [#allocation2], %s338
        %p340 = pneg %p77
        %p341 = pneg %p74
        %s342 = sand.u32 %s94, 1
        %s343 = scalar_lea.sflag [#allocation6], %s342
        %s344 = sand.u32 %s94, 1
        %s345 = smul.addr %s344, 8
        %s346 = scalar_lea.vmem [#allocation5], %s345
        %p347 = pneg %p107
        %p348 = pneg %p104
        %p349 = pneg %p135
        %p350 = pneg %p132
        %s351 = sand.u32 %s122, 1
        %s352 = scalar_lea.sflag [#allocation4], %s351
        %s353 = sand.u32 %s122, 1
        %s354 = smul.addr %s353, 32
        %s355 = scalar_lea.vmem [#allocation7], %s354
        %p356 = pneg %p163
        %p357 = pneg %p160
        %s358 = sand.u32 %s33, 1
        %s359 = scalar_lea.sflag [#allocation9], %s358
        %s360 = sand.u32 %s150, 1
        %s361 = smul.addr %s360, 32
        %s362 = scalar_lea.vmem [#allocation8], %s361
        %p363 = pneg %p191
        %p364 = pneg %p188
        %s365 = sand.u32 %s33, 1
        %s366 = scalar_lea.sflag [#allocation9], %s365
        %s367 = sand.u32 %s178, 1
        %s368 = smul.addr %s367, 32
        %s369 = scalar_lea.vmem [#allocation10], %s368
        %p370 = pneg %p219
        %p371 = pneg %p216
        %s372 = sand.u32 %s33, 1
        %s373 = scalar_lea.sflag [#allocation12], %s372
        %s374 = sand.u32 %s206, 1
        %s375 = smul.addr %s374, 8
        %s376 = scalar_lea.vmem [#allocation11], %s375
        %p377 = pneg %p247
        %p378 = pneg %p244
        %s379 = sand.u32 %s33, 1
        %s380 = scalar_lea.sflag [#allocation12], %s379
        %s381 = sand.u32 %s234, 1
        %s382 = smul.addr %s381, 8
        %s383 = scalar_lea.vmem [#allocation13], %s382
        %s384 = sadd.s32 %s38, %s40
        %s385 = sadd.s32 %s38, %s40
        %p386 = scmp.eq.s32.totalorder %s40, 0
        // Predicated region
        $region37: #{tpu_custom_call.1} parent=27 // pred_check
          %p387 = pneg %p386
        $region38: #{tpu_custom_call.1} parent=27 // pred_check_branch
          %389 = sbr.rel (%p387) target = $region40
        $region39: #{tpu_custom_call.1} parent=27 // pred_region
          %390 = vst [vmem:[%s355] sm:$0xff] 0.0
          %391 = vst [vmem:[%s355 + $0x8] sm:$0xff] 0.0
          %392 = vst [vmem:[%s355 + $0x10] sm:$0xff] 0.0
          %393 = vst [vmem:[%s355 + $0x18] sm:$0xff] 0.0
          %394 = vst [vmem:[%s362] sm:$0xff] 0.0
          %395 = vst [vmem:[%s362 + $0x8] sm:$0xff] 0.0
          %396 = vst [vmem:[%s362 + $0x10] sm:$0xff] 0.0
          %397 = vst [vmem:[%s362 + $0x18] sm:$0xff] 0.0
          %398 = vst [vmem:[%s369] sm:$0xff] 0.0
          %399 = vst [vmem:[%s369 + $0x8] sm:$0xff] 0.0
          %400 = vst [vmem:[%s369 + $0x10] sm:$0xff] 0.0
          %401 = vst [vmem:[%s369 + $0x18] sm:$0xff] 0.0
          %402 = vst [vmem:[%s376] sm:$0xff] 0.0
          %403 = vst [vmem:[%s383] sm:$0xff] 0.0
        $region40: #{tpu_custom_call.1} parent=27 // pred_fallthru
          _
        %v404 = vld [vmem:[%s321] sm:$0xff]
        %v405 = vld [vmem:[%s321 + $0x8] sm:$0xff]
        %v406 = vld [vmem:[%s321 + $0x10] sm:$0xff]
        %v407 = vld [vmem:[%s321 + $0x18] sm:$0xff]
        %v408 = vld [vmem:[%s330] sm:$0xff]
        %v409 = vmax.f32 %v404, %v405
        %v410 = vmax.f32 %v406, %v407
        %v411 = vmax.f32 %v409, %v410
        %v412 = vsub.f32 %v404, %v411
        %v413 = vsub.f32 %v405, %v411
        %v414 = vsub.f32 %v406, %v411
        %v415 = vsub.f32 %v407, %v411
        %v416 = vmul.f32 %v412, 1.442695
        %v417 = vpow.pop %v416
        %v418 = vmul.f32 %v413, 1.442695
        %v419 = vpow.pop %v418
        %v420 = vmul.f32 %v414, 1.442695
        %v421 = vpow.pop %v420
        %v422 = vmul.f32 %v415, 1.442695
        %v423 = vpow.pop %v422
        %v424 = vadd.f32 %v417, %v419
        %v425 = vadd.f32 %v424, %v421
        %v426 = vadd.f32 %v425, %v423
        %v427 = vrcp.pop %v426
        %v428 = vmul.f32 %v417, %v427
        %v429 = vmul.f32 %v419, %v427
        %v430 = vmul.f32 %v421, %v427
        %v431 = vmul.f32 %v423, %v427
        %vm432 = vcmp.eq.s32.totalorder %v408, 0
        %vm433 = vcmp.eq.s32.totalorder %v408, 1
        %vm434 = vcmp.eq.s32.totalorder %v408, 2
        %vm435 = vcmp.eq.s32.totalorder %v408, 3
        %v436 = vsel %vm432, 1, 0
        %v437 = vsel %vm433, 1, 0
        %v438 = vsel %vm434, 1, 0
        %v439 = vsel %vm435, 1, 0
        %v440 = vcvt.s32.f32 %v436
        %v441 = vcvt.s32.f32 %v437
        %v442 = vcvt.s32.f32 %v438
        %v443 = vcvt.s32.f32 %v439
        %v444 = vmul.f32 %v428, %v440
        %v445 = vmul.f32 %v429, %v441
        %v446 = vmul.f32 %v430, %v442
        %v447 = vmul.f32 %v431, %v443
        %vm448 = vcmp.ge.s32.totalorder %v408, 0
        %v449 = vsel %vm448, 1, 0
        %v450 = vcvt.s32.f32 %v449
        %v451 = vmul.f32 %v428, %v450
        %v452 = vmul.f32 %v429, %v450
        %v453 = vmul.f32 %v430, %v450
        %v454 = vmul.f32 %v431, %v450
        %v455 = vld [vmem:[%s355] sm:$0xff]
        %v456 = vld [vmem:[%s355 + $0x8] sm:$0xff]
        %v457 = vld [vmem:[%s355 + $0x10] sm:$0xff]
        %v458 = vld [vmem:[%s355 + $0x18] sm:$0xff]
        %v459 = vadd.f32 %v455, %v444
        %v460 = vadd.f32 %v456, %v445
        %v461 = vadd.f32 %v457, %v446
        %v462 = vadd.f32 %v458, %v447
        %463 = vst [vmem:[%s355] sm:$0xff] %v459
        %464 = vst [vmem:[%s355 + $0x8] sm:$0xff] %v460
        %465 = vst [vmem:[%s355 + $0x10] sm:$0xff] %v461
        %466 = vst [vmem:[%s355 + $0x18] sm:$0xff] %v462
        %v467 = vld [vmem:[%s362] sm:$0xff]
        %v468 = vld [vmem:[%s362 + $0x8] sm:$0xff]
        %v469 = vld [vmem:[%s362 + $0x10] sm:$0xff]
        %v470 = vld [vmem:[%s362 + $0x18] sm:$0xff]
        %v471 = vadd.f32 %v467, %v451
        %v472 = vadd.f32 %v468, %v452
        %v473 = vadd.f32 %v469, %v453
        %v474 = vadd.f32 %v470, %v454
        %475 = vst [vmem:[%s362] sm:$0xff] %v471
        %476 = vst [vmem:[%s362 + $0x8] sm:$0xff] %v472
        %477 = vst [vmem:[%s362 + $0x10] sm:$0xff] %v473
        %478 = vst [vmem:[%s362 + $0x18] sm:$0xff] %v474
        %v479 = vld [vmem:[%s369] sm:$0xff]
        %v480 = vld [vmem:[%s369 + $0x8] sm:$0xff]
        %v481 = vld [vmem:[%s369 + $0x10] sm:$0xff]
        %v482 = vld [vmem:[%s369 + $0x18] sm:$0xff]
        %v483 = vadd.f32 %v479, %v440
        %v484 = vadd.f32 %v480, %v441
        %v485 = vadd.f32 %v481, %v442
        %v486 = vadd.f32 %v482, %v443
        %487 = vst [vmem:[%s369] sm:$0xff] %v483
        %488 = vst [vmem:[%s369 + $0x8] sm:$0xff] %v484
        %489 = vst [vmem:[%s369 + $0x10] sm:$0xff] %v485
        %490 = vst [vmem:[%s369 + $0x18] sm:$0xff] %v486
        %v491 = vmul.f32 %v440, %v404
        %v492 = vmul.f32 %v441, %v405
        %v493 = vmul.f32 %v442, %v406
        %v494 = vmul.f32 %v443, %v407
        %v495 = vadd.f32 %v491, %v492
        %v496 = vadd.f32 %v495, %v493
        %v497 = vadd.f32 %v496, %v494
        %v498 = vlog2.pop %v426
        %v499 = vmul.f32 %v498, 0.6931472
        %v500 = vadd.f32 %v499, %v411
        %v501 = vsub.f32 %v500, %v497
        %v502 = vadd.f32 %v444, %v445
        %v503 = vadd.f32 %v502, %v446
        %v504 = vadd.f32 %v503, %v447
        %v505 = vmul.f32 %v504, 0.99998665
        %v506 = vadd.f32 %v505, 3.3333333e-06
        %v507 = vadd.f32 %v506, 1e-05
        %v508 = vsub.f32 1.0, %v507
        %v509 = vmul.f32 %v508, %v508
        %v510 = vsub.f32 0.0, %v509
        %v511 = vlog2.pop %v507
        %v512 = vmul.f32 %v511, 0.6931472
        %v513 = vmul.f32 %v510, %v512
        %v514 = vmul.f32 %v501, %v450
        %v515 = vmul.f32 %v513, %v450
        %v516 = vld [vmem:[%s376] sm:$0xff]
        %v517 = vadd.f32 %v516, %v514
        %518 = vst [vmem:[%s376] sm:$0xff] %v517
        %v519 = vld [vmem:[%s383] sm:$0xff]
        %v520 = vadd.f32 %v519, %v515
        %521 = vst [vmem:[%s383] sm:$0xff] %v520
        %s522 = sand.u32 %s122, 1
        %s523 = scalar_lea.sflag [#allocation4], %s522
        %s524 = sand.u32 %s122, 1
        %s525 = smul.addr %s524, 32
        %s526 = scalar_lea.vmem [#allocation7], %s525
        %s527 = sand.u32 %s33, 1
        %s528 = scalar_lea.sflag [#allocation9], %s527
        %s529 = sand.u32 %s150, 1
        %s530 = smul.addr %s529, 32
        %s531 = scalar_lea.vmem [#allocation8], %s530
        %s532 = sand.u32 %s33, 1
        %s533 = scalar_lea.sflag [#allocation9], %s532
        %s534 = sand.u32 %s178, 1
        %s535 = smul.addr %s534, 32
        %s536 = scalar_lea.vmem [#allocation10], %s535
        %s537 = sand.u32 %s33, 1
        %s538 = scalar_lea.sflag [#allocation12], %s537
        %s539 = sand.u32 %s206, 1
        %s540 = smul.addr %s539, 8
        %s541 = scalar_lea.vmem [#allocation11], %s540
        %s542 = sand.u32 %s33, 1
        %s543 = scalar_lea.sflag [#allocation12], %s542
        %s544 = sand.u32 %s234, 1
        %s545 = smul.addr %s544, 8
        %s546 = scalar_lea.vmem [#allocation13], %s545
        // Predicated region
        $region41: #{tpu_custom_call.1} parent=27 // pred_check
          %p547 = pneg %p132
        $region42: #{tpu_custom_call.1} parent=27 // pred_check_branch
          %549 = sbr.rel (%p547) target = $region44
        $region43: #{tpu_custom_call.1} parent=27 // pred_region
          %s551 = ssub.s32 512, 512
          %552 = vsyncadd %s523, %s551
          %s553 = smul.addr %s39, 4
          %s554 = smul.addr %s38, 8
          %s555 = sadd.s32 %s553, %s554
          %s556 = smul.addr %s555, 128
          %s557 = scalar_lea.hbm %s2, %s556
          %s558 = sshll.u32 %s526, 4
          %s559 = int_to_ptr.vmem [resolvable:$true] %s558
          %564 = dma.vmem_to_hbm [thread:$0]  %s559, 512, %s557, %s523, 128, 128, 8
        $region44: #{tpu_custom_call.1} parent=27 // pred_fallthru
          _
        // Predicated region
        $region45: #{tpu_custom_call.1} parent=27 // pred_check
          %p565 = pneg %p160
        $region46: #{tpu_custom_call.1} parent=27 // pred_check_branch
          %567 = sbr.rel (%p565) target = $region48
        $region47: #{tpu_custom_call.1} parent=27 // pred_region
          %s569 = ssub.s32 512, 512
          %570 = vsyncadd %s528, %s569
          %s571 = smul.addr %s39, 4
          %s572 = smul.addr %s38, 8
          %s573 = sadd.s32 %s571, %s572
          %s574 = smul.addr %s573, 128
          %s575 = scalar_lea.hbm %s3, %s574
          %s576 = sshll.u32 %s531, 4
          %s577 = int_to_ptr.vmem [resolvable:$true] %s576
          %582 = dma.vmem_to_hbm [thread:$0]  %s577, 512, %s575, %s528, 128, 128, 8
        $region48: #{tpu_custom_call.1} parent=27 // pred_fallthru
          _
        // Predicated region
        $region49: #{tpu_custom_call.1} parent=27 // pred_check
          %p583 = pneg %p188
        $region50: #{tpu_custom_call.1} parent=27 // pred_check_branch
          %585 = sbr.rel (%p583) target = $region52
        $region51: #{tpu_custom_call.1} parent=27 // pred_region
          %s587 = ssub.s32 512, 512
          %588 = vsyncadd %s533, %s587
          %s589 = smul.addr %s39, 4
          %s590 = smul.addr %s38, 8
          %s591 = sadd.s32 %s589, %s590
          %s592 = smul.addr %s591, 128
          %s593 = scalar_lea.hbm %s4, %s592
          %s594 = sshll.u32 %s536, 4
          %s595 = int_to_ptr.vmem [resolvable:$true] %s594
          %600 = dma.vmem_to_hbm [thread:$0]  %s595, 512, %s593, %s533, 128, 128, 8
        $region52: #{tpu_custom_call.1} parent=27 // pred_fallthru
          _
        // Predicated region
        $region53: #{tpu_custom_call.1} parent=27 // pred_check
          %p601 = pneg %p216
        $region54: #{tpu_custom_call.1} parent=27 // pred_check_branch
          %603 = sbr.rel (%p601) target = $region56
        $region55: #{tpu_custom_call.1} parent=27 // pred_region
          %s605 = ssub.s32 128, 128
          %606 = vsyncadd %s538, %s605
          %s607 = smul.addr %s38, 2
          %s608 = sadd.s32 %s39, %s607
          %s609 = smul.addr %s608, 128
          %s610 = scalar_lea.hbm %s5, %s609
          %s612 = sshll.u32 %s541, 4
          %s613 = int_to_ptr.vmem [resolvable:$true] %s612
          %615 = dma.vmem_to_hbm [thread:$0]  %s613, 128, %s610, %s538
        $region56: #{tpu_custom_call.1} parent=27 // pred_fallthru
          _
        // Predicated region
        $region57: #{tpu_custom_call.1} parent=27 // pred_check
          %p616 = pneg %p244
        $region58: #{tpu_custom_call.1} parent=27 // pred_check_branch
          %618 = sbr.rel (%p616) target = $region60
        $region59: #{tpu_custom_call.1} parent=27 // pred_region
          %s620 = ssub.s32 128, 128
          %621 = vsyncadd %s543, %s620
          %s622 = smul.addr %s38, 2
          %s623 = sadd.s32 %s39, %s622
          %s624 = smul.addr %s623, 128
          %s625 = scalar_lea.hbm %s6, %s624
          %s627 = sshll.u32 %s546, 4
          %s628 = int_to_ptr.vmem [resolvable:$true] %s627
          %630 = dma.vmem_to_hbm [thread:$0]  %s628, 128, %s625, %s543
        $region60: #{tpu_custom_call.1} parent=27 // pred_fallthru
          _
      $region28: #{tpu_custom_call.1} parent=5 // pred_fallthru
        _
      %p631 = scmp.le.s32.totalorder 2, %s28
      // Predicated region
      $region61: #{tpu_custom_call.1} parent=5 // pred_check
        %p632 = pneg %p631
      $region62: #{tpu_custom_call.1} parent=5 // pred_check_branch
        %634 = sbr.rel (%p632) target = $region64
      $region63: #{tpu_custom_call.1} parent=5 // pred_region
        %s635 = ssub.s32 %s28, 2
        // Predicated region
        $region65: #{tpu_custom_call.1} parent=63 // pred_check
          %p636 = pneg %p138
        $region66: #{tpu_custom_call.1} parent=63 // pred_check_branch
          %638 = sbr.rel (%p636) target = $region68
        $region67: #{tpu_custom_call.1} parent=63 // pred_region
          %s639 = sand.u32 %s123, 1
          %s640 = scalar_lea.sflag [#allocation4], %s639
          %s641 = sand.u32 %s123, 1
          %s642 = smul.addr %s641, 32
          %s643 = scalar_lea.vmem [#allocation7], %s642
          %644 = dma.done %s640, 512
        $region68: #{tpu_custom_call.1} parent=63 // pred_fallthru
          _
        // Predicated region
        $region69: #{tpu_custom_call.1} parent=63 // pred_check
          %p645 = pneg %p166
        $region70: #{tpu_custom_call.1} parent=63 // pred_check_branch
          %647 = sbr.rel (%p645) target = $region72
        $region71: #{tpu_custom_call.1} parent=63 // pred_region
          %s648 = sand.u32 %s34, 1
          %s649 = scalar_lea.sflag [#allocation9], %s648
          %s650 = sand.u32 %s151, 1
          %s651 = smul.addr %s650, 32
          %s652 = scalar_lea.vmem [#allocation8], %s651
          %653 = dma.done %s649, 512
        $region72: #{tpu_custom_call.1} parent=63 // pred_fallthru
          _
        // Predicated region
        $region73: #{tpu_custom_call.1} parent=63 // pred_check
          %p654 = pneg %p194
        $region74: #{tpu_custom_call.1} parent=63 // pred_check_branch
          %656 = sbr.rel (%p654) target = $region76
        $region75: #{tpu_custom_call.1} parent=63 // pred_region
          %s657 = sand.u32 %s34, 1
          %s658 = scalar_lea.sflag [#allocation9], %s657
          %s659 = sand.u32 %s179, 1
          %s660 = smul.addr %s659, 32
          %s661 = scalar_lea.vmem [#allocation10], %s660
          %662 = dma.done %s658, 512
        $region76: #{tpu_custom_call.1} parent=63 // pred_fallthru
          _
        // Predicated region
        $region77: #{tpu_custom_call.1} parent=63 // pred_check
          %p663 = pneg %p222
        $region78: #{tpu_custom_call.1} parent=63 // pred_check_branch
          %665 = sbr.rel (%p663) target = $region80
        $region79: #{tpu_custom_call.1} parent=63 // pred_region
          %s666 = sand.u32 %s34, 1
          %s667 = scalar_lea.sflag [#allocation12], %s666
          %s668 = sand.u32 %s207, 1
          %s669 = smul.addr %s668, 8
          %s670 = scalar_lea.vmem [#allocation11], %s669
          %671 = dma.done %s667, 128
        $region80: #{tpu_custom_call.1} parent=63 // pred_fallthru
          _
        // Predicated region
        $region81: #{tpu_custom_call.1} parent=63 // pred_check
          %p672 = pneg %p250
        $region82: #{tpu_custom_call.1} parent=63 // pred_check_branch
          %674 = sbr.rel (%p672) target = $region84
        $region83: #{tpu_custom_call.1} parent=63 // pred_region
          %s675 = sand.u32 %s34, 1
          %s676 = scalar_lea.sflag [#allocation12], %s675
          %s677 = sand.u32 %s235, 1
          %s678 = smul.addr %s677, 8
          %s679 = scalar_lea.vmem [#allocation13], %s678
          %680 = dma.done %s676, 128
        $region84: #{tpu_custom_call.1} parent=63 // pred_fallthru
          _
      $region64: #{tpu_custom_call.1} parent=5 // pred_fallthru
        _
    $region6: #{tpu_custom_call.1} parent=1 // loop_footer
      %s32 = sadd.s32 1, %s28
    $region7: #{tpu_custom_call.1} parent=1 // loop_footer_branch
      %27 = sbr.rel target = $region3
    $region8: #{tpu_custom_call.1} parent=1 // loop_exit
      _
    %681 = vsyncpa [#allocation3], 1
    %s682 = scalar_lea.sflag [#allocation3], 1
    %683 = vsyncpa %s682, 1
    %684 = vsyncpa [#allocation6], 1
    %s685 = scalar_lea.sflag [#allocation6], 1
    %686 = vsyncpa %s685, 1
    %687 = vsyncpa [#allocation4], 1
    %s688 = scalar_lea.sflag [#allocation4], 1
    %689 = vsyncpa %s688, 1
    %690 = vsyncpa [#allocation9], 1
    %s691 = scalar_lea.sflag [#allocation9], 1
    %692 = vsyncpa %s691, 1
    %693 = vsyncpa [#allocation12], 1
    %s694 = scalar_lea.sflag [#allocation12], 1
    %695 = vsyncpa %s694, 1

</llo_original>
